<compile_context>
chip_gen: v7x
topology: tpu7x:2x2x1
jax: 0.10.0
libtpu: 0.0.40
codegen_flags: <defaults>
</compile_context>

<pallas_src>
import functools
from collections import namedtuple

import jax
import jax.numpy as jnp
from jax.experimental import pallas as pl
from jax.experimental.pallas import tpu as pltpu


# ----------------------- per-generation tiling budget ------------------------

@functools.lru_cache(maxsize=1)
def _budget():
    """VMEM limit + tile targets chosen per TPU generation."""
    default_vmem = 64 * 1024 * 1024
    try:
        info = pltpu.get_tpu_info()
        vmem_cap = int(getattr(info, "vmem_capacity_bytes", default_vmem))
    except Exception:
        vmem_cap = default_vmem
    if vmem_cap >= 100 * 1024 * 1024:           # v5e / v6e: 128 MiB physical VMEM
        return {"vmem": 96 * 1024 * 1024, "tm": 512, "tk": 512, "tn": 512, "tf": 512}
    else:                                        # v7x: 64 MiB physical per TC
        return {"vmem": 40 * 1024 * 1024, "tm": 256, "tk": 512, "tn": 512, "tf": 256}


def _round_up(x, m):
    return ((x + m - 1) // m) * m


def _divisor_tile(dim, target, granule=128):
    """Largest multiple of `granule` <= target that divides dim (or dim itself)."""
    if dim <= target:
        return dim
    t = (target // granule) * granule
    while t >= granule:
        if dim % t == 0:
            return t
        t -= granule
    return dim


def _pad_rows(x, tm_target):
    """Pad leading (row) axis to a tileable size; returns (padded, row_tile).
    Toy shapes never actually pad; at production, guarantee tileable M upstream."""
    m = x.shape[0]
    if m <= tm_target:
        m_pad, tm = _round_up(m, 8), _round_up(m, 8)
    else:
        m_pad, tm = _round_up(m, tm_target), tm_target
    if m_pad != m:
        x = jnp.pad(x, ((0, m_pad - m),) + ((0, 0),) * (x.ndim - 1))
    return x, tm


# --------------------- vision projection (+ fused row-norm) -----------------
# grid = (M tiles [parallel], K tiles [arbitrary, innermost reduction]).
# The output block (i,0) is resident across the K reduction, so we accumulate
# into it directly (no scratch).  Per-M-tile row-norm partial sums are emitted
# so the M axis stays 'parallel' (megacore on v7x); the mean is reduced in JAX.

def _vision_proj_kernel(x_ref, w_ref, b_ref, o_ref, nsum_ref, *, m_true, tm):
    i, k = pl.program_id(0), pl.program_id(1)
    n_k = pl.num_programs(1)

    @pl.when(k == 0)
    def _():
        o_ref[...] = jnp.zeros_like(o_ref)

    o_ref[...] += jnp.dot(x_ref[...].astype(jnp.bfloat16), w_ref[...],
                          preferred_element_type=jnp.float32)

    @pl.when(k == n_k - 1)
    def _():
        y = o_ref[...] + b_ref[...]
        o_ref[...] = y
        row = jax.lax.broadcasted_iota(jnp.int32, (tm, 1), 0) + i * tm
        rmask = (row < m_true).astype(jnp.float32)          # ignore padded rows
        nsum_ref[0, 0] = jnp.sum(
            jnp.sqrt(jnp.sum(y * y, axis=-1, keepdims=True)) * rmask)


def vision_projection(merged, w_bf16, b_f32):
    """(M,K) @ (K,H) + (H,), plus fused mean row-norm epilogue."""
    bud = _budget()
    m_true, K = merged.shape
    H = w_bf16.shape[1]
    x, tm = _pad_rows(merged, bud["tm"])
    m_pad = x.shape[0]
    tk = _divisor_tile(K, bud["tk"])
    n_i = m_pad // tm
    out, nsum = pl.pallas_call(
        functools.partial(_vision_proj_kernel, m_true=m_true, tm=tm),
        out_shape=(jax.ShapeDtypeStruct((m_pad, H), jnp.float32),
                   jax.ShapeDtypeStruct((n_i, 1), jnp.float32)),
        grid=(n_i, K // tk),
        in_specs=[pl.BlockSpec((tm, tk), lambda i, k: (i, k)),
                  pl.BlockSpec((tk, H), lambda i, k: (k, 0)),
                  pl.BlockSpec((1, H), lambda i, k: (0, 0))],
        out_specs=(pl.BlockSpec((tm, H), lambda i, k: (i, 0)),
                   pl.BlockSpec((1, 1), lambda i, k: (i, 0),
                                memory_space=pltpu.MemorySpace.SMEM)),
        compiler_params=pltpu.CompilerParams(
            dimension_semantics=("parallel", "arbitrary"),
            vmem_limit_bytes=bud["vmem"]),
    )(x, w_bf16, b_f32.reshape(1, H))
    return out[:m_true], jnp.sum(nsum) / m_true


# ------------------------- tiled mean row-norm kernel ------------------------
# (input_embs_norm is over the PRE-scatter embeddings, so it cannot be fused
#  into the decoder-stack kernel which consumes post-scatter embeddings.)
# Per-tile partial sums -> 'parallel' M axis; final mean reduced in JAX.

def _row_norm_kernel(x_ref, o_ref, *, m_true, tm):
    i = pl.program_id(0)
    x = x_ref[...].astype(jnp.float32)
    row = jax.lax.broadcasted_iota(jnp.int32, (tm, 1), 0) + i * tm
    rmask = (row < m_true).astype(jnp.float32)
    o_ref[0, 0] = jnp.sum(jnp.sqrt(jnp.sum(x * x, axis=-1, keepdims=True)) * rmask)


def row_norm_mean(x2d):
    bud = _budget()
    m_true, H = x2d.shape
    x, tm = _pad_rows(x2d, bud["tm"])
    n_i = x.shape[0] // tm
    part = pl.pallas_call(
        functools.partial(_row_norm_kernel, m_true=m_true, tm=tm),
        out_shape=jax.ShapeDtypeStruct((n_i, 1), jnp.float32),
        grid=(n_i,),
        in_specs=[pl.BlockSpec((tm, H), lambda i: (i, 0))],
        out_specs=pl.BlockSpec((1, 1), lambda i: (i, 0),
                               memory_space=pltpu.MemorySpace.SMEM),
        compiler_params=pltpu.CompilerParams(
            dimension_semantics=("parallel",),
            vmem_limit_bytes=bud["vmem"]),
    )(x)
    return jnp.sum(part) / m_true


# ---------------- fused decoder stack: one pallas_call for all layers --------
# grid = (layer, FFN tile, M tile) — weights OUTER, M INNER:
#   * w1/w2/b1 blocks (l,*,f) are constant across the innermost M loop -> every
#     weight block is DMA'd exactly once for the whole kernel (no per-M-tile
#     re-streaming).
#   * the residual stream h and the FFN accumulator live in full-M (M_pad,H) f32
#     VMEM scratch, sliced with pl.ds per M tile (carry relocated from the old
#     per-tile layout — required by the regrid).
#   * per-layer hidden state is an output block spanning the whole M axis with
#     index (l,0,0) -> written back exactly once per layer, in bf16.

def _lm_stack_kernel(embs_ref, w1_ref, b1_ref, w2_ref, b2_ref,
                     hs_ref, h_carry, acc_ref, *, tm):
    l, f, i = pl.program_id(0), pl.program_id(1), pl.program_id(2)
    n_f = pl.num_programs(1)
    row0 = pl.multiple_of(i * tm, 8)
    isl = pl.ds(row0, tm)
    H = acc_ref.shape[1]

    @pl.when(jnp.logical_and(l == 0, f == 0))
    def _():
        h_carry[isl, :] = embs_ref[isl, :]          # residual stream starts at embs (f32)

    @pl.when(f == 0)
    def _():
        acc_ref[isl, :] = jnp.zeros((tm, H), jnp.float32)

    hb = h_carry[isl, :].astype(jnp.bfloat16)                        # (tm, H) bf16
    z = jnp.dot(hb, w1_ref[...], preferred_element_type=jnp.float32) + b1_ref[...]
    # TODO(synk): the real Qwen2 LM uses a SiLU-gated MLP; this toy stand-in uses
    # tanh-gelu (torch nn.GELU default is exact erf) — kept for EUP-friendly lowering.
    a = jax.nn.gelu(z, approximate=True)
    acc_ref[isl, :] += jnp.dot(a.astype(jnp.bfloat16), w2_ref[...],
                               preferred_element_type=jnp.float32)

    @pl.when(f == n_f - 1)
    def _():
        h_new = h_carry[isl, :] + acc_ref[isl, :] + b2_ref[...]      # residual
        h_carry[isl, :] = h_new
        hs_ref[isl, :] = h_new.astype(hs_ref.dtype)                  # bf16 writeback


def lm_stack(embs_flat, w1s, b1s, w2s, b2s):
    """Runs all L layers in a single pallas_call. Returns padded (L, M_pad, H) bf16."""
    bud = _budget()
    m_true, H = embs_flat.shape
    L, _, F = w1s.shape
    x, tm = _pad_rows(embs_flat, bud["tm"])
    m_pad = x.shape[0]
    tf = _divisor_tile(F, bud["tf"])
    grid = (L, F // tf, m_pad // tm)
    hs = pl.pallas_call(
        functools.partial(_lm_stack_kernel, tm=tm),
        out_shape=jax.ShapeDtypeStruct((L, m_pad, H), jnp.bfloat16),
        grid=grid,
        in_specs=[pl.BlockSpec((m_pad, H), lambda l, f, i: (0, 0)),       # resident embs
                  pl.BlockSpec((None, H, tf), lambda l, f, i: (l, 0, f)),
                  pl.BlockSpec((None, 1, tf), lambda l, f, i: (l, 0, f)),
                  pl.BlockSpec((None, tf, H), lambda l, f, i: (l, f, 0)),
                  pl.BlockSpec((None, 1, H), lambda l, f, i: (l, 0, 0))],
        out_specs=pl.BlockSpec((None, m_pad, H), lambda l, f, i: (l, 0, 0)),
        scratch_shapes=[pltpu.VMEM((m_pad, H), jnp.float32),   # residual stream carry
                        pltpu.VMEM((m_pad, H), jnp.float32)],  # FFN-reduction accumulator
        compiler_params=pltpu.CompilerParams(
            dimension_semantics=("arbitrary", "arbitrary", "arbitrary"),
            vmem_limit_bytes=bud["vmem"]),
    )(x, w1s, b1s, w2s, b2s)
    return hs


# ------------------ fused lm_head + shifted cross-entropy --------------------
# 1-D grid over vocab tiles; the (M_pad,H) bf16 activations and (M_pad,1) labels
# are fully VMEM-resident, so both they and the (H,V) bf16 head weight are
# streamed exactly once.  Online max/logsumexp + target gather state is kept in
# (M_pad,1) f32 scratch; masked-mean loss emitted on the last vocab tile.

def _head_ce_kernel(h_ref, w_ref, lab_ref, logits_ref, loss_ref,
                    m_sc, l_sc, t_sc):
    j = pl.program_id(0)
    n_j = pl.num_programs(0)

    @pl.when(j == 0)
    def _():
        m_sc[...] = jnp.full_like(m_sc, -jnp.inf)
        l_sc[...] = jnp.zeros_like(l_sc)
        t_sc[...] = jnp.zeros_like(t_sc)

    logits = jnp.dot(h_ref[...], w_ref[...],
                     preferred_element_type=jnp.float32)             # (M_pad, tv) f32
    logits_ref[...] = logits.astype(logits_ref.dtype)

    labels = lab_ref[...]                                            # (M_pad, 1) int32
    tv = logits.shape[1]
    col = jax.lax.broadcasted_iota(jnp.int32, logits.shape, 1) + j * tv
    t_sc[...] += jnp.sum(jnp.where(col == labels, logits, 0.0), axis=-1, keepdims=True)

    m_new = jnp.maximum(m_sc[...], jnp.max(logits, axis=-1, keepdims=True))
    alpha = jnp.exp(m_sc[...] - m_new)
    l_sc[...] = alpha * l_sc[...] + jnp.sum(jnp.exp(logits - m_new), axis=-1,
                                            keepdims=True)
    m_sc[...] = m_new

    @pl.when(j == n_j - 1)
    def _():
        lse = m_sc[...] + jnp.log(l_sc[...])
        valid = (labels != -100).astype(jnp.float32)                 # torch ignore_index
        num = jnp.sum((lse - t_sc[...]) * valid)
        den = jnp.sum(valid)
        # NOTE: torch returns NaN when every label is ignored; we return 0 instead.
        loss_ref[0, 0] = num / jnp.maximum(den, 1.0)


def lm_head_ce(h_pad, w_head_bf16, ce_labels_pad):
    """h_pad: (M_pad, H) bf16 last-layer hidden states; returns padded logits + loss."""
    bud = _budget()
    m_pad, H = h_pad.shape
    V = w_head_bf16.shape[1]
    lab = ce_labels_pad.astype(jnp.int32).reshape(m_pad, 1)
    tv = _divisor_tile(V, bud["tn"])
    logits, loss = pl.pallas_call(
        _head_ce_kernel,
        out_shape=(jax.ShapeDtypeStruct((m_pad, V), jnp.float32),
                   jax.ShapeDtypeStruct((1, 1), jnp.float32)),
        grid=(V // tv,),
        in_specs=[pl.BlockSpec((m_pad, H), lambda j: (0, 0)),        # resident activations
                  pl.BlockSpec((H, tv), lambda j: (0, j)),           # streamed once
                  pl.BlockSpec((m_pad, 1), lambda j: (0, 0))],       # resident labels
        out_specs=(pl.BlockSpec((m_pad, tv), lambda j: (0, j)),
                   pl.BlockSpec((1, 1), lambda j: (0, 0),
                                memory_space=pltpu.MemorySpace.SMEM)),
        scratch_shapes=[pltpu.VMEM((m_pad, 1), jnp.float32),
                        pltpu.VMEM((m_pad, 1), jnp.float32),
                        pltpu.VMEM((m_pad, 1), jnp.float32)],
        compiler_params=pltpu.CompilerParams(
            dimension_semantics=("arbitrary",),
            vmem_limit_bytes=bud["vmem"]),
    )(h_pad, w_head_bf16, lab)
    return logits, loss[0, 0]


# ------------------------------- GILL model ----------------------------------

GILLOutput = namedtuple("GILLOutput", ["loss", "logits", "hidden_states"])


def init_gill_params(key, *, vocab, hidden, patch_dim, merge, ffn, num_layers,
                     ret_emb_dim=256):
    """Deterministic synthetic stand-ins for the Qwen2-VL + GILL parameters.
    Streamed matmul weights are stored in bf16; biases / embeddings in f32."""
    ks = jax.random.split(key, 4 + 2 * num_layers)
    params = {
        "embed":        jax.random.normal(ks[0], (vocab, hidden), jnp.float32) * 0.02,
        "vision_w":     (jax.random.normal(ks[1], (merge * patch_dim, hidden),
                                           jnp.float32) * 0.02).astype(jnp.bfloat16),
        "vision_b":     jnp.zeros((hidden,), jnp.float32),
        "vision_merge": merge,
        "lm_head":      (jax.random.normal(ks[2], (hidden, vocab),
                                           jnp.float32) * 0.02).astype(jnp.bfloat16),
        # unused in captioning mode, kept to mirror __init__ shapes:
        "visual_fc_w":  jax.random.normal(ks[3], (hidden, ret_emb_dim), jnp.float32) * 0.02,
        "logit_scale":  jnp.asarray(jnp.log(1.0 / 0.07), jnp.float32),
    }
    w1s, w2s = [], []
    for l in range(num_layers):
        k1, k2 = ks[4 + 2 * l], ks[5 + 2 * l]
        w1s.append((jax.random.normal(k1, (hidden, ffn), jnp.float32) * 0.02)
                   .astype(jnp.bfloat16))
        w2s.append((jax.random.normal(k2, (ffn, hidden), jnp.float32) * 0.02)
                   .astype(jnp.bfloat16))
    params["w1s"] = jnp.stack(w1s)                                   # (L, H, F) bf16
    params["b1s"] = jnp.zeros((num_layers, 1, ffn), jnp.float32)     # (L, 1, F)
    params["w2s"] = jnp.stack(w2s)                                   # (L, F, H) bf16
    params["b2s"] = jnp.zeros((num_layers, 1, hidden), jnp.float32)  # (L, 1, H)
    return params


def gill_forward(params, pixel_values, image_grid_thw, input_ids, labels,
                 image_token_id, mode="captioning"):
    """Mirrors GILLModel.forward for mode='captioning' (the default)."""
    if mode != "captioning":
        # TODO(synk): retrieval/generation branches need layers.TextFcLayer
        # ('gill_mapper'), whose source is not in the reference module.
        raise NotImplementedError(mode)

    B, S = input_ids.shape
    H = params["embed"].shape[1]
    m_true = B * S

    # ---- get_visual_embs (captioning): patch merge + projection (+ fused norm) ----
    pv = jnp.concatenate(list(pixel_values), axis=0)              # (total_patches, patch_dim)
    merge = params["vision_merge"]
    merged = pv.reshape(pv.shape[0] // merge, merge * pv.shape[1])
    visual_embs, visual_embs_norm = vision_projection(
        merged, params["vision_w"], params["vision_b"])           # (n_vis, H), scalar

    # ---- token embeddings (gather = glue); norm is pre-scatter ----
    input_embs = params["embed"][input_ids]                       # (B, S, H) f32
    flat_pre = input_embs.reshape(m_true, H)
    input_embs_norm = row_norm_mean(flat_pre)

    # ---- masked_scatter: j-th image-token slot gets j-th visual embedding row ----
    flat_mask = (input_ids == image_token_id).reshape(-1)
    slot = jnp.cumsum(flat_mask.astype(jnp.int32)) - 1
    gathered = visual_embs[jnp.clip(slot, 0, visual_embs.shape[0] - 1)]
    flat = jnp.where(flat_mask[:, None], gathered.astype(flat_pre.dtype), flat_pre)
    input_embs_scat = flat.reshape(B, S, H)

    # ---- toy frozen LM, all layers in a single pallas_call (output_hidden_states) ----
    hs = lm_stack(flat, params["w1s"], params["b1s"], params["w2s"], params["b2s"])
    m_pad = hs.shape[1]
    # NOTE: per-layer hidden states are bf16 (halved HBM writeback); torch keeps f32.
    hidden_states = (input_embs_scat,) + tuple(
        hs[l, :m_true].reshape(B, S, H) for l in range(hs.shape[0]))

    # ---- fused lm_head + shifted cross-entropy (labels aligned per row) ----
    ce_labels = jnp.concatenate(
        [labels[:, 1:], jnp.full((B, 1), -100, labels.dtype)], axis=1).reshape(-1)
    if m_pad != m_true:
        ce_labels = jnp.concatenate(
            [ce_labels, jnp.full((m_pad - m_true,), -100, ce_labels.dtype)])
    logits_pad, loss = lm_head_ce(hs[-1], params["lm_head"], ce_labels)
    V = params["lm_head"].shape[1]
    logits = logits_pad[:m_true].reshape(B, S, V)

    output = GILLOutput(loss=loss, logits=logits, hidden_states=hidden_states)

    # captioning mode: retrieval/generation heads unused
    last_embedding = None
    last_output_logit = None
    llm_hidden_states = []
    return (output, labels, last_embedding, last_output_logit,
            visual_embs, visual_embs_norm, input_embs_norm, llm_hidden_states)


# ---------------------------------- main ------------------------------------

if __name__ == "__main__":
    B, S = 2, 8               # batch, sequence
    H, V = 128, 1024          # hidden size, vocab size (2 vocab tiles of 512)
    PATCH_DIM = 256           # flattened vision patch dim
    MERGE = 4                 # Qwen2-VL-style 2x2 spatial merge (K = 1024 -> 2 K tiles)
    PATCHES_PER_IMG = 8       # -> 2 visual tokens per image
    FFN = 1024                # 2 (or 4 on v7x) FFN tiles
    NUM_LAYERS = 2
    IMAGE_TOKEN_ID = 3

    root = jax.random.PRNGKey(0)
    k_params, k_pv0, k_pv1 = jax.random.split(root, 3)
    params = init_gill_params(k_params, vocab=V, hidden=H, patch_dim=PATCH_DIM,
                              merge=MERGE, ffn=FFN, num_layers=NUM_LAYERS)

    pixel_values = [
        jax.random.normal(k_pv0, (PATCHES_PER_IMG, PATCH_DIM), jnp.float32) * 0.5,
        jax.random.normal(k_pv1, (PATCHES_PER_IMG, PATCH_DIM), jnp.float32) * 0.5,
    ]
    image_grid_thw = jnp.array([[1, 2, 4], [1, 2, 4]], dtype=jnp.int32)  # unused by toy VM

    input_ids = jnp.array(
        [[5, IMAGE_TOKEN_ID, IMAGE_TOKEN_ID, 10, 11, 12, 13, 14],
         [6, IMAGE_TOKEN_ID, IMAGE_TOKEN_ID, 20, 21, 22, 23, 24]], dtype=jnp.int32)
    labels = input_ids.at[:, 1:3].set(-100)   # ignore image-token positions in the loss

    out = gill_forward(params, pixel_values, image_grid_thw, input_ids, labels,
                       IMAGE_TOKEN_ID, mode="captioning")
    (output, out_labels, last_embedding, last_output_logit,
     visual_embs, visual_embs_norm, input_embs_norm, llm_hidden_states) = out

    jax.block_until_ready(output.loss)

    # shape / sanity checks
    assert output.logits.shape == (B, S, V)
    assert output.logits.dtype == jnp.float32
    assert visual_embs.shape == (2 * PATCHES_PER_IMG // MERGE, H)
    assert len(output.hidden_states) == NUM_LAYERS + 1
    assert bool(jnp.isfinite(output.loss))
    assert bool(jnp.isfinite(visual_embs_norm)) and bool(jnp.isfinite(input_embs_norm))

    # self-consistency: fused online-LSE CE vs. direct log_softmax on kernel logits
    sl = output.logits[:, :-1, :].reshape(-1, V).astype(jnp.float32)
    st = labels[:, 1:].reshape(-1)
    lp = jax.nn.log_softmax(sl, axis=-1)
    tgt = jnp.take_along_axis(lp, jnp.maximum(st, 0)[:, None], axis=-1)[:, 0]
    valid = (st != -100)
    ref_loss = -(jnp.where(valid, tgt, 0.0).sum() / jnp.maximum(valid.sum(), 1))
    assert abs(float(ref_loss) - float(output.loss)) < 1e-3 * max(1.0, abs(float(ref_loss)))

    # self-consistency: fused norm epilogue vs. recomputed mean row-norm
    ref_vnorm = float(jnp.sqrt((visual_embs.astype(jnp.float32) ** 2).sum(-1)).mean())
    assert abs(ref_vnorm - float(visual_embs_norm)) < 1e-3 * max(1.0, ref_vnorm)

    # self-consistency: input_embs_norm partial-sum kernel vs. direct computation
    ref_inorm = float(jnp.sqrt((params["embed"][input_ids].astype(jnp.float32) ** 2)
                               .sum(-1)).mean())
    assert abs(ref_inorm - float(input_embs_norm)) < 1e-3 * max(1.0, ref_inorm)

    print("KERNEL_OK")
</pallas_src>

<mosaic_0001>
module attributes {stable_mosaic.version = 11 : i64} {
  func.func @_vision_proj_kernel(%arg0: i32, %arg1: i32, %arg2: memref<8x512xf32, #tpu.memory_space<vmem>>, %arg3: memref<512x128xbf16, #tpu.memory_space<vmem>>, %arg4: memref<1x128xf32, #tpu.memory_space<vmem>>, %arg5: memref<8x128xf32, #tpu.memory_space<vmem>>, %arg6: memref<1x1xf32, #tpu.memory_space<smem>>) attributes {dimension_semantics = [#tpu.dimension_semantics<parallel>, #tpu.dimension_semantics<arbitrary>], iteration_bounds = array<i64: 1, 2>, scalar_prefetch = 0 : i64, scratch_operands = 0 : i64, tpu.core_type = #tpu.core_type<tc>, window_params = [{transform_indices = @transform_0, window_bounds = array<i64: 8, 512>}, {transform_indices = @transform_1, window_bounds = array<i64: 512, 128>}, {pipeline_mode = #tpu.pipeline_mode<synchronous>, transform_indices = @transform_2, window_bounds = array<i64: 1, 128>}, {transform_indices = @transform_3, window_bounds = array<i64: 8, 128>}, {transform_indices = @transform_4, window_bounds = array<i64: 1, 1>}]} {
    %c0_i32 = arith.constant 0 : i32
    %0 = arith.cmpi eq, %arg1, %c0_i32 : i32
    %1 = arith.extui %0 : i1 to i32
    %c0_i32_0 = arith.constant 0 : i32
    %2 = arith.cmpi ne, %1, %c0_i32_0 : i32
    scf.if %2 {
      %cst_9 = arith.constant 0.000000e+00 : f32
      %13 = vector.broadcast %cst_9 : f32 to vector<8x128xf32>
      %c0_10 = arith.constant 0 : index
      %c0_11 = arith.constant 0 : index
      %14 = vector.load %arg5[%c0_10, %c0_11] : memref<8x128xf32, #tpu.memory_space<vmem>>, vector<8x128xf32>
      tpu.vector_store %arg5[%c0_10, %c0_11], %13 {strides = array<i32>} : memref<8x128xf32, #tpu.memory_space<vmem>>, vector<8x128xf32>,
    } else {
    }
    %c0 = arith.constant 0 : index
    %c0_1 = arith.constant 0 : index
    %3 = vector.load %arg5[%c0, %c0_1] : memref<8x128xf32, #tpu.memory_space<vmem>>, vector<8x128xf32>
    %c0_2 = arith.constant 0 : index
    %c0_3 = arith.constant 0 : index
    %4 = vector.load %arg2[%c0_2, %c0_3] : memref<8x512xf32, #tpu.memory_space<vmem>>, vector<8x512xf32>
    %5 = arith.truncf %4 : vector<8x512xf32> to vector<8x512xbf16>
    %c0_4 = arith.constant 0 : index
    %c0_5 = arith.constant 0 : index
    %6 = vector.load %arg3[%c0_4, %c0_5] : memref<512x128xbf16, #tpu.memory_space<vmem>>, vector<512x128xbf16>
    %cst = arith.constant dense<0.000000e+00> : vector<8x128xf32>
    %7 = tpu.matmul %5, %6, %cst {dimension_numbers = #tpu.dot_dimension_numbers<[1], [0], [0], [1], [0, 0, 1, 1], [], []>} : vector<8x512xbf16>, vector<512x128xbf16>, vector<8x128xf32> -> vector<8x128xf32>
    %8 = arith.addf %3, %7 : vector<8x128xf32>
    %c0_6 = arith.constant 0 : index
    %c0_7 = arith.constant 0 : index
    %9 = vector.load %arg5[%c0_6, %c0_7] : memref<8x128xf32, #tpu.memory_space<vmem>>, vector<8x128xf32>
    tpu.vector_store %arg5[%c0_6, %c0_7], %8 {strides = array<i32>} : memref<8x128xf32, #tpu.memory_space<vmem>>, vector<8x128xf32>,
    %c1_i32 = arith.constant 1 : i32
    %10 = arith.cmpi eq, %arg1, %c1_i32 : i32
    %11 = arith.extui %10 : i1 to i32
    %c0_i32_8 = arith.constant 0 : i32
    %12 = arith.cmpi ne, %11, %c0_i32_8 : i32
    scf.if %12 {
      %c0_9 = arith.constant 0 : index
      %c0_10 = arith.constant 0 : index
      %13 = vector.load %arg5[%c0_9, %c0_10] : memref<8x128xf32, #tpu.memory_space<vmem>>, vector<8x128xf32>
      %c0_11 = arith.constant 0 : index
      %c0_12 = arith.constant 0 : index
      %14 = vector.load %arg4[%c0_11, %c0_12] : memref<1x128xf32, #tpu.memory_space<vmem>>, vector<1x128xf32>
      %15 = vector.broadcast %14 : vector<1x128xf32> to vector<8x128xf32>
      %16 = arith.addf %13, %15 : vector<8x128xf32>
      %c0_13 = arith.constant 0 : index
      %c0_14 = arith.constant 0 : index
      %17 = vector.load %arg5[%c0_13, %c0_14] : memref<8x128xf32, #tpu.memory_space<vmem>>, vector<8x128xf32>
      tpu.vector_store %arg5[%c0_13, %c0_14], %16 {strides = array<i32>} : memref<8x128xf32, #tpu.memory_space<vmem>>, vector<8x128xf32>,
      %18 = tpu.iota {dimensions = array<i32: 0>} : vector<8x1xi32>
      %c8_i32 = arith.constant 8 : i32
      %19 = arith.muli %arg0, %c8_i32 : i32
      %20 = vector.broadcast %19 : i32 to vector<8x1xi32>
      %21 = arith.addi %18, %20 : vector<8x1xi32>
      %c4_i32 = arith.constant 4 : i32
      %22 = vector.broadcast %c4_i32 : i32 to vector<8x1xi32>
      %23 = arith.cmpi slt, %21, %22 : vector<8x1xi32>
      %24 = arith.extui %23 : vector<8x1xi1> to vector<8x1xi32>
      %25 = arith.sitofp %24 : vector<8x1xi32> to vector<8x1xf32>
      %26 = arith.mulf %16, %16 : vector<8x128xf32>
      %cst_15 = arith.constant dense<0.000000e+00> : vector<8xf32>
      %27 = vector.multi_reduction <add>, %26, %cst_15 [1] : vector<8x128xf32> to vector<8xf32>
      %28 = vector.shape_cast %27 : vector<8xf32> to vector<8x1xf32>
      %29 = math.sqrt %28 : vector<8x1xf32>
      %30 = arith.mulf %29, %25 : vector<8x1xf32>
      %31 = vector.shape_cast %30 : vector<8x1xf32> to vector<1x8x1xf32>
      %cst_16 = arith.constant dense<0.000000e+00> : vector<1xf32>
      %32 = vector.multi_reduction <add>, %31, %cst_16 [1, 2] : vector<1x8x1xf32> to vector<1xf32>
      %33 = vector.shape_cast %32 : vector<1xf32> to vector<1x1x1xf32>
      %34 = vector.extract %33[0, 0, 0] : f32 from vector<1x1x1xf32>
      %c0_17 = arith.constant 0 : index
      %c0_18 = arith.constant 0 : index
      %35 = memref.load %arg6[%c0_17, %c0_18] : memref<1x1xf32, #tpu.memory_space<smem>>
      memref.store %34, %arg6[%c0_17, %c0_18] : memref<1x1xf32, #tpu.memory_space<smem>>
    } else {
    }
    return
  }
  func.func @transform_0(%arg0: i32, %arg1: i32) -> (i32, i32) {
    %c0_i32 = arith.constant 0 : i32
    return %arg0, %arg1 : i32, i32
  }
  func.func @transform_1(%arg0: i32, %arg1: i32) -> (i32, i32) {
    %c0_i32 = arith.constant 0 : i32
    %c0_i32_0 = arith.constant 0 : i32
    return %arg1, %c0_i32 : i32, i32
  }
  func.func @transform_2(%arg0: i32, %arg1: i32) -> (i32, i32) {
    %c0_i32 = arith.constant 0 : i32
    %c0_i32_0 = arith.constant 0 : i32
    %c0_i32_1 = arith.constant 0 : i32
    return %c0_i32, %c0_i32_0 : i32, i32
  }
  func.func @transform_3(%arg0: i32, %arg1: i32) -> (i32, i32) {
    %c0_i32 = arith.constant 0 : i32
    %c0_i32_0 = arith.constant 0 : i32
    return %arg0, %c0_i32 : i32, i32
  }
  func.func @transform_4(%arg0: i32, %arg1: i32) -> (i32, i32) {
    %c0_i32 = arith.constant 0 : i32
    %c0_i32_0 = arith.constant 0 : i32
    return %arg0, %c0_i32 : i32, i32
  }
}

</mosaic_0001>

<llo_original>
// kernel: tpu_custom_call.1
$region0: #{tpu_custom_call.1}
  #allocation0 [shape = 'u32[]', space=smem, size = 0x4, offset = 0x4, fixed_abs, tag = 'smem constant byte address 0x4 - core index']
  #allocation1 [shape = 'u32[144,128]{1,0:T(1,128)}', space=vmem, size = 0x12000, scoped, tag = 'internal scratch']
  %s0 = inlined_call_operand.hbm [shape: f32[8,1024], index: 0, kind: input, shape index: {}]
  %s1 = inlined_call_operand.hbm [shape: bf16[1024,128], index: 1, kind: input, shape index: {}]
  %s2 = inlined_call_operand.vmem [shape: f32[1,128], index: 2, kind: input, shape index: {}]
  %s3 = inlined_call_operand.hbm [shape: f32[8,128], index: 3, kind: output, shape index: {0}]
  %s4 = inlined_call_operand.hbm [shape: f32[1,1], index: 4, kind: output, shape index: {1}]
  %5 = xla_tuple %s3, %s4
  %s6 = sld [smem:[#allocation0]]
  $region69: #{tpu_custom_call.1} parent=0
    _
  %s8 = ssub.s32 1, %s6
  %s9 = scalar_select 0, %s8, %s6
  $region1: #{tpu_custom_call.1} parent=0
    #allocation2 [shape = 'u8[32768]{0}', space=vmem, size = 0x8000, scoped, tag = 'input window, operand 0']
    #allocation3 [shape = 's32[2]{0}', space=sflag, size = 0x8, scoped, tag = 'scoped memory for tpu_custom_call.1']
    #allocation4 [shape = 's32[2]{0}', space=sflag, size = 0x8, scoped, tag = 'scoped memory for tpu_custom_call.1']
    #allocation5 [shape = 's32[2]{0}', space=sflag, size = 0x8, scoped, tag = 'scoped memory for tpu_custom_call.1']
    #allocation6 [shape = 'u8[262144]{0}', space=vmem, size = 0x40000, scoped, tag = 'input window, operand 1']
    #allocation7 [shape = 's32[2]{0}', space=sflag, size = 0x8, scoped, tag = 'scoped memory for tpu_custom_call.1']
    #allocation8 [shape = 'u8[4096]{0}', space=vmem, size = 0x1000, scoped, tag = 'output window, operand 0, single buffered']
    #allocation9 [shape = 'u8[512]{0}', space=smem, size = 0x200, scoped, tag = 'output window, operand 1, single buffered']
    %10 = vsyncpa [#allocation3], 0
    %s11 = scalar_lea.sflag [#allocation3], 1
    %12 = vsyncpa %s11, 0
    %13 = vsyncpa [#allocation7], 0
    %s14 = scalar_lea.sflag [#allocation7], 1
    %15 = vsyncpa %s14, 0
    %16 = vsyncpa [#allocation4], 0
    %17 = vsyncpa [#allocation5], 0
    loop: start=0, step=1, limit=4
    $region2: #{tpu_custom_call.1} parent=1 // loop_pre_header
      _
    $region3: #{tpu_custom_call.1} parent=1 // loop_header
      %s19 = sphi 0, %s23
      %p20 = scmp.ge.s32.totalorder %s19, 4
      %s26 = sphi 0, %s38
      %s27 = sphi 0, %s34
      %s28 = sphi 0, %s26
      %s29 = sphi 0, %s27
      %s30 = sphi 0, %s28
      %s31 = sphi 0, %s29
      %s43 = sphi 0, %s45
      %s46 = sphi 0, %s43
      %s47 = sphi 0, %s46
      %s63 = sphi 0, %s47
      %s69 = sphi 0, %s71
      %s72 = sphi 0, %s69
      %s73 = sphi 0, %s72
      %s89 = sphi 0, %s73
      %s93 = sphi 0, %s93
      %s95 = sphi 0, %s93
      %s96 = sphi 0, %s95
      %s110 = sphi 0, %s96
      %s116 = sphi 0, %s118
      %s119 = sphi 0, %s116
      %s120 = sphi 0, %s119
      %s136 = sphi 0, %s120
      %s142 = sphi 0, %s144
      %s145 = sphi 0, %s142
      %s146 = sphi 0, %s145
      %s162 = sphi 0, %s146
    $region4: #{tpu_custom_call.1} parent=1 // loop_header_branch
      %22 = sbr.rel (%p20) target = $region8
    $region5: #{tpu_custom_call.1} parent=1 // loop_body
      %s24 = ssub.s32 %s19, 1
      %s25 = ssub.s32 %s19, 2
      %s32 = sadd.s32 1, %s27
      %p33 = scmp.ge.s32.totalorder %s32, 2
      %s34 = scalar_select %p33, 0, %s32
      %s35 = sadd.s32 1, %s26
      %s36 = scalar_select %p33, %s35, %s26
      %p37 = scmp.ge.s32.totalorder %s36, 1
      %s38 = scalar_select %p37, 0, %s36
      %s39 = ssub.s32 %s26, %s38
      %s40 = ssub.s32 %s27, %s34
      %s41 = sor.u32 %s39, %s40
      %p42 = scmp.eq.s32.totalorder %s41, 0
      %s44 = sadd.s32 %s43, 1
      %s45 = scalar_select %p42, %s43, %s44
      %p48 = pneg %p42
      %p49 = scmp.eq.s32.totalorder %s19, 1
      %p50 = por %p48, %p49
      %p51 = scmp.ne.s32.totalorder %s43, %s46
      %p52 = scmp.eq.s32.totalorder %s19, 0
      %p53 = por %p51, %p52
      %p54 = scmp.ne.s32.totalorder %s43, %s46
      %p55 = scmp.eq.s32.totalorder %s24, 1
      %p56 = por %p54, %p55
      %p57 = scmp.ne.s32.totalorder %s46, %s47
      %p58 = scmp.eq.s32.totalorder %s24, 0
      %p59 = por %p57, %p58
      %p60 = scmp.ne.s32.totalorder %s46, %s47
      %p61 = scmp.eq.s32.totalorder %s25, 1
      %p62 = por %p60, %p61
      %p64 = scmp.ne.s32.totalorder %s47, %s63
      %p65 = scmp.eq.s32.totalorder %s25, 0
      %p66 = por %p64, %p65
      %s67 = ssub.s32 %s27, %s34
      %p68 = scmp.eq.s32.totalorder %s67, 0
      %s70 = sadd.s32 %s69, 1
      %s71 = scalar_select %p68, %s69, %s70
      %p74 = pneg %p68
      %p75 = scmp.eq.s32.totalorder %s19, 1
      %p76 = por %p74, %p75
      %p77 = scmp.ne.s32.totalorder %s69, %s72
      %p78 = scmp.eq.s32.totalorder %s19, 0
      %p79 = por %p77, %p78
      %p80 = scmp.ne.s32.totalorder %s69, %s72
      %p81 = scmp.eq.s32.totalorder %s24, 1
      %p82 = por %p80, %p81
      %p83 = scmp.ne.s32.totalorder %s72, %s73
      %p84 = scmp.eq.s32.totalorder %s24, 0
      %p85 = por %p83, %p84
      %p86 = scmp.ne.s32.totalorder %s72, %s73
      %p87 = scmp.eq.s32.totalorder %s25, 1
      %p88 = por %p86, %p87
      %p90 = scmp.ne.s32.totalorder %s73, %s89
      %p91 = scmp.eq.s32.totalorder %s25, 0
      %p92 = por %p90, %p91
      %s94 = sadd.s32 %s93, 1
      %p97 = scmp.eq.s32.totalorder %s19, 1
      %p98 = scmp.ne.s32.totalorder %s93, %s95
      %p99 = scmp.eq.s32.totalorder %s19, 0
      %p100 = por %p98, %p99
      %p101 = scmp.ne.s32.totalorder %s93, %s95
      %p102 = scmp.eq.s32.totalorder %s24, 1
      %p103 = por %p101, %p102
      %p104 = scmp.ne.s32.totalorder %s95, %s96
      %p105 = scmp.eq.s32.totalorder %s24, 0
      %p106 = por %p104, %p105
      %p107 = scmp.ne.s32.totalorder %s95, %s96
      %p108 = scmp.eq.s32.totalorder %s25, 1
      %p109 = por %p107, %p108
      %p111 = scmp.ne.s32.totalorder %s96, %s110
      %p112 = scmp.eq.s32.totalorder %s25, 0
      %p113 = por %p111, %p112
      %s114 = ssub.s32 %s26, %s38
      %p115 = scmp.eq.s32.totalorder %s114, 0
      %s117 = sadd.s32 %s116, 1
      %s118 = scalar_select %p115, %s116, %s117
      %p121 = pneg %p115
      %p122 = scmp.eq.s32.totalorder %s19, 1
      %p123 = por %p121, %p122
      %p124 = scmp.ne.s32.totalorder %s116, %s119
      %p125 = scmp.eq.s32.totalorder %s19, 0
      %p126 = por %p124, %p125
      %p127 = scmp.ne.s32.totalorder %s116, %s119
      %p128 = scmp.eq.s32.totalorder %s24, 1
      %p129 = por %p127, %p128
      %p130 = scmp.ne.s32.totalorder %s119, %s120
      %p131 = scmp.eq.s32.totalorder %s24, 0
      %p132 = por %p130, %p131
      %p133 = scmp.ne.s32.totalorder %s119, %s120
      %p134 = scmp.eq.s32.totalorder %s25, 1
      %p135 = por %p133, %p134
      %p137 = scmp.ne.s32.totalorder %s120, %s136
      %p138 = scmp.eq.s32.totalorder %s25, 0
      %p139 = por %p137, %p138
      %s140 = ssub.s32 %s26, %s38
      %p141 = scmp.eq.s32.totalorder %s140, 0
      %s143 = sadd.s32 %s142, 1
      %s144 = scalar_select %p141, %s142, %s143
      %p147 = pneg %p141
      %p148 = scmp.eq.s32.totalorder %s19, 1
      %p149 = por %p147, %p148
      %p150 = scmp.ne.s32.totalorder %s142, %s145
      %p151 = scmp.eq.s32.totalorder %s19, 0
      %p152 = por %p150, %p151
      %p153 = scmp.ne.s32.totalorder %s142, %s145
      %p154 = scmp.eq.s32.totalorder %s24, 1
      %p155 = por %p153, %p154
      %p156 = scmp.ne.s32.totalorder %s145, %s146
      %p157 = scmp.eq.s32.totalorder %s24, 0
      %p158 = por %p156, %p157
      %p159 = scmp.ne.s32.totalorder %s145, %s146
      %p160 = scmp.eq.s32.totalorder %s25, 1
      %p161 = por %p159, %p160
      %p163 = scmp.ne.s32.totalorder %s146, %s162
      %p164 = scmp.eq.s32.totalorder %s25, 0
      %p165 = por %p163, %p164
      %p166 = scmp.le.s32.totalorder 1, %s19
      %p167 = scmp.lt.s32.totalorder %s19, 3
      %p168 = pnand %p166, %p167
      %p169 = pneg %p168
      // Predicated region
      $region9: #{tpu_custom_call.1} parent=5 // pred_check
        _
      $region10: #{tpu_custom_call.1} parent=5 // pred_check_branch
        %171 = sbr.rel (%p168) target = $region12
      $region11: #{tpu_custom_call.1} parent=5 // pred_region
        %s172 = ssub.s32 %s19, 1
        // Predicated region
        $region13: #{tpu_custom_call.1} parent=11 // pred_check
          %p173 = pneg %p106
        $region14: #{tpu_custom_call.1} parent=11 // pred_check_branch
          %175 = sbr.rel (%p173) target = $region16
        $region15: #{tpu_custom_call.1} parent=11 // pred_region
          _
        $region16: #{tpu_custom_call.1} parent=11 // pred_fallthru
          _
      $region12: #{tpu_custom_call.1} parent=5 // pred_fallthru
        _
      %p176 = scmp.lt.s32.totalorder %s19, 2
      // Predicated region
      $region17: #{tpu_custom_call.1} parent=5 // pred_check
        %p177 = pneg %p176
      $region18: #{tpu_custom_call.1} parent=5 // pred_check_branch
        %179 = sbr.rel (%p177) target = $region20
      $region19: #{tpu_custom_call.1} parent=5 // pred_region
        // Predicated region
        $region21: #{tpu_custom_call.1} parent=19 // pred_check
          %p180 = pneg %p53
        $region22: #{tpu_custom_call.1} parent=19 // pred_check_branch
          %182 = sbr.rel (%p180) target = $region24
        $region23: #{tpu_custom_call.1} parent=19 // pred_region
          %s183 = sand.u32 %s43, 1
          %s184 = scalar_lea.sflag [#allocation3], %s183
          %s185 = sand.u32 %s43, 1
          %s186 = smul.addr %s185, 32
          %s187 = scalar_lea.vmem [#allocation2], %s186
          %s188 = smul.u32 4, %s27
          %s190 = ssub.s32 512, 512
          %191 = vsyncadd %s184, %s190
          %s192 = smul.addr %s26, 8
          %s193 = sadd.s32 %s188, %s192
          %s194 = smul.addr %s193, 128
          %s195 = scalar_lea.hbm %s0, %s194
          %s197 = sshll.u32 %s187, 4
          %s198 = int_to_ptr.vmem [resolvable:$true] %s197
          %200 = dma.hbm_to_vmem [thread:$0]  %s195, 512, %s198, %s184
        $region24: #{tpu_custom_call.1} parent=19 // pred_fallthru
          _
        // Predicated region
        $region25: #{tpu_custom_call.1} parent=19 // pred_check
          %p201 = pneg %p79
        $region26: #{tpu_custom_call.1} parent=19 // pred_check_branch
          %203 = sbr.rel (%p201) target = $region28
        $region27: #{tpu_custom_call.1} parent=19 // pred_region
          %s204 = sand.u32 %s69, 1
          %s205 = scalar_lea.sflag [#allocation7], %s204
          %s206 = sand.u32 %s69, 1
          %s207 = smul.addr %s206, 256
          %s208 = scalar_lea.vmem [#allocation6], %s207
          %s209 = smul.u32 64, %s27
          %s211 = ssub.s32 4096, 4096
          %212 = vsyncadd %s205, %s211
          %s213 = smul.addr %s209, 64
          %s214 = scalar_lea.hbm %s1, %s213
          %s215 = sshll.u32 %s208, 4
          %s216 = int_to_ptr.vmem [resolvable:$true] %s215
          %221 = dma.hbm_to_vmem [thread:$0]  %s214, 4096, %s216, %s205, 64, 64, 4
        $region28: #{tpu_custom_call.1} parent=19 // pred_fallthru
          _
      $region20: #{tpu_custom_call.1} parent=5 // pred_fallthru
        _
      %p222 = scmp.le.s32.totalorder 1, %s19
      %p223 = scmp.lt.s32.totalorder %s19, 3
      %p224 = pnand %p222, %p223
      %p225 = pneg %p224
      // Predicated region
      $region29: #{tpu_custom_call.1} parent=5 // pred_check
        _
      $region30: #{tpu_custom_call.1} parent=5 // pred_check_branch
        %227 = sbr.rel (%p224) target = $region32
      $region31: #{tpu_custom_call.1} parent=5 // pred_region
        %s228 = ssub.s32 %s19, 1
        %s229 = sand.u32 %s46, 1
        %s230 = scalar_lea.sflag [#allocation3], %s229
        %s231 = sand.u32 %s46, 1
        %s232 = smul.addr %s231, 32
        %s233 = scalar_lea.vmem [#allocation2], %s232
        // Predicated region
        $region33: #{tpu_custom_call.1} parent=31 // pred_check
          %p234 = pneg %p59
        $region34: #{tpu_custom_call.1} parent=31 // pred_check_branch
          %236 = sbr.rel (%p234) target = $region36
        $region35: #{tpu_custom_call.1} parent=31 // pred_region
          %237 = dma.done %s230, 512
        $region36: #{tpu_custom_call.1} parent=31 // pred_fallthru
          _
        %s238 = sand.u32 %s72, 1
        %s239 = scalar_lea.sflag [#allocation7], %s238
        %s240 = sand.u32 %s72, 1
        %s241 = smul.addr %s240, 256
        %s242 = scalar_lea.vmem [#allocation6], %s241
        // Predicated region
        $region37: #{tpu_custom_call.1} parent=31 // pred_check
          %p243 = pneg %p85
        $region38: #{tpu_custom_call.1} parent=31 // pred_check_branch
          %245 = sbr.rel (%p243) target = $region40
        $region39: #{tpu_custom_call.1} parent=31 // pred_region
          %246 = dma.done %s239, 4096
        $region40: #{tpu_custom_call.1} parent=31 // pred_fallthru
          _
        %s247 = sand.u32 %s46, 1
        %s248 = scalar_lea.sflag [#allocation3], %s247
        %s249 = sand.u32 %s46, 1
        %s250 = smul.addr %s249, 32
        %s251 = scalar_lea.vmem [#allocation2], %s250
        %p252 = pneg %p59
        %p253 = pneg %p56
        %s254 = sand.u32 %s72, 1
        %s255 = scalar_lea.sflag [#allocation7], %s254
        %s256 = sand.u32 %s72, 1
        %s257 = smul.addr %s256, 256
        %s258 = scalar_lea.vmem [#allocation6], %s257
        %p259 = pneg %p85
        %p260 = pneg %p82
        %p261 = pneg %p106
        %p262 = pneg %p103
        %p263 = pneg %p132
        %p264 = pneg %p129
        %p265 = pneg %p158
        %p266 = pneg %p155
        %s267 = smul.u32 4, %s29
        %s268 = smul.u32 64, %s29
        %p270 = scmp.eq.s32.totalorder %s29, 0
        // Predicated region
        $region41: #{tpu_custom_call.1} parent=31 // pred_check
          %p271 = pneg %p270
        $region42: #{tpu_custom_call.1} parent=31 // pred_check_branch
          %273 = sbr.rel (%p271) target = $region44
        $region43: #{tpu_custom_call.1} parent=31 // pred_region
          %274 = vst [vmem:[#allocation8] sm:$0xff] 0.0
        $region44: #{tpu_custom_call.1} parent=31 // pred_fallthru
          _
        %v275 = vld [vmem:[#allocation8] sm:$0xff]
        %v276 = vld [vmem:[%s233] sm:$0xff]
        %v277 = vld [vmem:[%s233 + $0x8] sm:$0xff]
        %v278 = vld [vmem:[%s233 + $0x10] sm:$0xff]
        %v279 = vld [vmem:[%s233 + $0x18] sm:$0xff]
        %v280 = vpack.c.bf16 %v276, %v276
        %v281 = vpack.c.bf16 %v277, %v277
        %v282 = vpack.c.bf16 %v278, %v278
        %v283 = vpack.c.bf16 %v279, %v279
        %v284 = vld [vmem:[%s242] sm:$0xf]
        %v285 = vld [vmem:[%s242 + $0x4] sm:$0xf]
        %v286 = vld [vmem:[%s242 + $0x8] sm:$0xf]
        %v287 = vld [vmem:[%s242 + $0xc] sm:$0xf]
        %v288 = vld [vmem:[%s242 + $0x10] sm:$0xf]
        %v289 = vld [vmem:[%s242 + $0x14] sm:$0xf]
        %v290 = vld [vmem:[%s242 + $0x18] sm:$0xf]
        %v291 = vld [vmem:[%s242 + $0x1c] sm:$0xf]
        %v292 = vld [vmem:[%s242 + $0x20] sm:$0xf]
        %v293 = vld [vmem:[%s242 + $0x24] sm:$0xf]
        %v294 = vld [vmem:[%s242 + $0x28] sm:$0xf]
        %v295 = vld [vmem:[%s242 + $0x2c] sm:$0xf]
        %v296 = vld [vmem:[%s242 + $0x30] sm:$0xf]
        %v297 = vld [vmem:[%s242 + $0x34] sm:$0xf]
        %v298 = vld [vmem:[%s242 + $0x38] sm:$0xf]
        %v299 = vld [vmem:[%s242 + $0x3c] sm:$0xf]
        %v300 = vld [vmem:[%s242 + $0x40] sm:$0xf]
        %v301 = vld [vmem:[%s242 + $0x44] sm:$0xf]
        %v302 = vld [vmem:[%s242 + $0x48] sm:$0xf]
        %v303 = vld [vmem:[%s242 + $0x4c] sm:$0xf]
        %v304 = vld [vmem:[%s242 + $0x50] sm:$0xf]
        %v305 = vld [vmem:[%s242 + $0x54] sm:$0xf]
        %v306 = vld [vmem:[%s242 + $0x58] sm:$0xf]
        %v307 = vld [vmem:[%s242 + $0x5c] sm:$0xf]
        %v308 = vld [vmem:[%s242 + $0x60] sm:$0xf]
        %v309 = vld [vmem:[%s242 + $0x64] sm:$0xf]
        %v310 = vld [vmem:[%s242 + $0x68] sm:$0xf]
        %v311 = vld [vmem:[%s242 + $0x6c] sm:$0xf]
        %v312 = vld [vmem:[%s242 + $0x70] sm:$0xf]
        %v313 = vld [vmem:[%s242 + $0x74] sm:$0xf]
        %v314 = vld [vmem:[%s242 + $0x78] sm:$0xf]
        %v315 = vld [vmem:[%s242 + $0x7c] sm:$0xf]
        %v316 = vld [vmem:[%s242 + $0x80] sm:$0xf]
        %v317 = vld [vmem:[%s242 + $0x84] sm:$0xf]
        %v318 = vld [vmem:[%s242 + $0x88] sm:$0xf]
        %v319 = vld [vmem:[%s242 + $0x8c] sm:$0xf]
        %v320 = vld [vmem:[%s242 + $0x90] sm:$0xf]
        %v321 = vld [vmem:[%s242 + $0x94] sm:$0xf]
        %v322 = vld [vmem:[%s242 + $0x98] sm:$0xf]
        %v323 = vld [vmem:[%s242 + $0x9c] sm:$0xf]
        %v324 = vld [vmem:[%s242 + $0xa0] sm:$0xf]
        %v325 = vld [vmem:[%s242 + $0xa4] sm:$0xf]
        %v326 = vld [vmem:[%s242 + $0xa8] sm:$0xf]
        %v327 = vld [vmem:[%s242 + $0xac] sm:$0xf]
        %v328 = vld [vmem:[%s242 + $0xb0] sm:$0xf]
        %v329 = vld [vmem:[%s242 + $0xb4] sm:$0xf]
        %v330 = vld [vmem:[%s242 + $0xb8] sm:$0xf]
        %v331 = vld [vmem:[%s242 + $0xbc] sm:$0xf]
        %v332 = vld [vmem:[%s242 + $0xc0] sm:$0xf]
        %v333 = vld [vmem:[%s242 + $0xc4] sm:$0xf]
        %v334 = vld [vmem:[%s242 + $0xc8] sm:$0xf]
        %v335 = vld [vmem:[%s242 + $0xcc] sm:$0xf]
        %v336 = vld [vmem:[%s242 + $0xd0] sm:$0xf]
        %v337 = vld [vmem:[%s242 + $0xd4] sm:$0xf]
        %v338 = vld [vmem:[%s242 + $0xd8] sm:$0xf]
        %v339 = vld [vmem:[%s242 + $0xdc] sm:$0xf]
        %v340 = vld [vmem:[%s242 + $0xe0] sm:$0xf]
        %v341 = vld [vmem:[%s242 + $0xe4] sm:$0xf]
        %v342 = vld [vmem:[%s242 + $0xe8] sm:$0xf]
        %v343 = vld [vmem:[%s242 + $0xec] sm:$0xf]
        %v344 = vld [vmem:[%s242 + $0xf0] sm:$0xf]
        %v345 = vld [vmem:[%s242 + $0xf4] sm:$0xf]
        %v346 = vld [vmem:[%s242 + $0xf8] sm:$0xf]
        %v347 = vld [vmem:[%s242 + $0xfc] sm:$0xf]
        %v412 = vunpack.c.l.b16 %v284
        %v413 = vunpack.c.l.b16 %v285
        %v414 = vunpack.c.l.b16 %v286
        %v415 = vunpack.c.l.b16 %v287
        %v416 = vunpack.c.l.b16 %v288
        %v417 = vunpack.c.l.b16 %v289
        %v418 = vunpack.c.l.b16 %v290
        %v419 = vunpack.c.l.b16 %v291
        %v420 = vunpack.c.l.b16 %v292
        %v421 = vunpack.c.l.b16 %v293
        %v422 = vunpack.c.l.b16 %v294
        %v423 = vunpack.c.l.b16 %v295
        %v424 = vunpack.c.l.b16 %v296
        %v425 = vunpack.c.l.b16 %v297
        %v426 = vunpack.c.l.b16 %v298
        %v427 = vunpack.c.l.b16 %v299
        %v428 = vunpack.c.l.b16 %v300
        %v429 = vunpack.c.l.b16 %v301
        %v430 = vunpack.c.l.b16 %v302
        %v431 = vunpack.c.l.b16 %v303
        %v432 = vunpack.c.l.b16 %v304
        %v433 = vunpack.c.l.b16 %v305
        %v434 = vunpack.c.l.b16 %v306
        %v435 = vunpack.c.l.b16 %v307
        %v436 = vunpack.c.l.b16 %v308
        %v437 = vunpack.c.l.b16 %v309
        %v438 = vunpack.c.l.b16 %v310
        %v439 = vunpack.c.l.b16 %v311
        %v440 = vunpack.c.l.b16 %v312
        %v441 = vunpack.c.l.b16 %v313
        %v442 = vunpack.c.l.b16 %v314
        %v443 = vunpack.c.l.b16 %v315
        %v444 = vunpack.c.l.b16 %v316
        %v445 = vunpack.c.l.b16 %v317
        %v446 = vunpack.c.l.b16 %v318
        %v447 = vunpack.c.l.b16 %v319
        %v448 = vunpack.c.l.b16 %v320
        %v449 = vunpack.c.l.b16 %v321
        %v450 = vunpack.c.l.b16 %v322
        %v451 = vunpack.c.l.b16 %v323
        %v452 = vunpack.c.l.b16 %v324
        %v453 = vunpack.c.l.b16 %v325
        %v454 = vunpack.c.l.b16 %v326
        %v455 = vunpack.c.l.b16 %v327
        %v456 = vunpack.c.l.b16 %v328
        %v457 = vunpack.c.l.b16 %v329
        %v458 = vunpack.c.l.b16 %v330
        %v459 = vunpack.c.l.b16 %v331
        %v460 = vunpack.c.l.b16 %v332
        %v461 = vunpack.c.l.b16 %v333
        %v462 = vunpack.c.l.b16 %v334
        %v463 = vunpack.c.l.b16 %v335
        %v464 = vunpack.c.l.b16 %v336
        %v465 = vunpack.c.l.b16 %v337
        %v466 = vunpack.c.l.b16 %v338
        %v467 = vunpack.c.l.b16 %v339
        %v468 = vunpack.c.l.b16 %v340
        %v469 = vunpack.c.l.b16 %v341
        %v470 = vunpack.c.l.b16 %v342
        %v471 = vunpack.c.l.b16 %v343
        %v472 = vunpack.c.l.b16 %v344
        %v473 = vunpack.c.l.b16 %v345
        %v474 = vunpack.c.l.b16 %v346
        %v475 = vunpack.c.l.b16 %v347
        %v476 = vpack.c.b16 %v413, %v412
        %v477 = vpack.c.b16 %v415, %v414
        %v478 = vpack.c.b16 %v417, %v416
        %v479 = vpack.c.b16 %v419, %v418
        %v480 = vpack.c.b16 %v421, %v420
        %v481 = vpack.c.b16 %v423, %v422
        %v482 = vpack.c.b16 %v425, %v424
        %v483 = vpack.c.b16 %v427, %v426
        %v484 = vpack.c.b16 %v429, %v428
        %v485 = vpack.c.b16 %v431, %v430
        %v486 = vpack.c.b16 %v433, %v432
        %v487 = vpack.c.b16 %v435, %v434
        %v488 = vpack.c.b16 %v437, %v436
        %v489 = vpack.c.b16 %v439, %v438
        %v490 = vpack.c.b16 %v441, %v440
        %v491 = vpack.c.b16 %v443, %v442
        %v492 = vpack.c.b16 %v445, %v444
        %v493 = vpack.c.b16 %v447, %v446
        %v494 = vpack.c.b16 %v449, %v448
        %v495 = vpack.c.b16 %v451, %v450
        %v496 = vpack.c.b16 %v453, %v452
        %v497 = vpack.c.b16 %v455, %v454
        %v498 = vpack.c.b16 %v457, %v456
        %v499 = vpack.c.b16 %v459, %v458
        %v500 = vpack.c.b16 %v461, %v460
        %v501 = vpack.c.b16 %v463, %v462
        %v502 = vpack.c.b16 %v465, %v464
        %v503 = vpack.c.b16 %v467, %v466
        %v504 = vpack.c.b16 %v469, %v468
        %v505 = vpack.c.b16 %v471, %v470
        %v506 = vpack.c.b16 %v473, %v472
        %v507 = vpack.c.b16 %v475, %v474
        %540 = vmatprep.subr.bf16.mxu0 0
        %541 = vmatpush1.bf16.msra.mxu0 %v476
        %542 = vmatprep.subr.bf16.mxu0 0
        %543 = vmatpush1.bf16.msra.mxu0 %v477
        %544 = vmatprep.subr.bf16.mxu0 0
        %545 = vmatpush1.bf16.msra.mxu0 %v478
        %546 = vmatprep.subr.bf16.mxu0 0
        %547 = vmatpush1.bf16.msra.mxu0 %v479
        %548 = vmatprep.subr.bf16.mxu0 0
        %549 = vmatpush1.bf16.msra.mxu0 %v480
        %550 = vmatprep.subr.bf16.mxu0 0
        %551 = vmatpush1.bf16.msra.mxu0 %v481
        %552 = vmatprep.subr.bf16.mxu0 0
        %553 = vmatpush1.bf16.msra.mxu0 %v482
        %554 = vmatprep.subr.bf16.mxu0 0
        %555 = vmatpush1.bf16.msra.mxu0 %v483
        %556 = vmatprep.subr.bf16.mxu0 0
        %557 = vmatpush1.bf16.msra.mxu0 %v484
        %558 = vmatprep.subr.bf16.mxu0 0
        %559 = vmatpush1.bf16.msra.mxu0 %v485
        %560 = vmatprep.subr.bf16.mxu0 0
        %561 = vmatpush1.bf16.msra.mxu0 %v486
        %562 = vmatprep.subr.bf16.mxu0 0
        %563 = vmatpush1.bf16.msra.mxu0 %v487
        %564 = vmatprep.subr.bf16.mxu0 0
        %565 = vmatpush1.bf16.msra.mxu0 %v488
        %566 = vmatprep.subr.bf16.mxu0 0
        %567 = vmatpush1.bf16.msra.mxu0 %v489
        %568 = vmatprep.subr.bf16.mxu0 0
        %569 = vmatpush1.bf16.msra.mxu0 %v490
        %570 = vmatprep.subr.bf16.mxu0 0
        %571 = vmatpush1.bf16.msra.mxu0 %v491
        %572 = vmatprep.mubr.bf16.mxu0 %v281
        %573 = vmatmul.mubr.bf16.gmra.mrb[0].mxu0 %v280
        %v574 = vpop.f32.mrb[0].mxu0
        %v575 = vadd.f32 0.0, %v574
        %v576 = vpop.f32.mrb[0].mxu0
        %v577 = vpop.f32.mrb[0].mxu0
        %v578 = vpop.f32.mrb[0].mxu0
        %579 = vdwg.mxu0
        %580 = vmatprep.subr.bf16.mxu0 0
        %581 = vmatpush1.bf16.msra.mxu0 %v492
        %582 = vmatprep.subr.bf16.mxu0 0
        %583 = vmatpush1.bf16.msra.mxu0 %v493
        %584 = vmatprep.subr.bf16.mxu0 0
        %585 = vmatpush1.bf16.msra.mxu0 %v494
        %586 = vmatprep.subr.bf16.mxu0 0
        %587 = vmatpush1.bf16.msra.mxu0 %v495
        %588 = vmatprep.subr.bf16.mxu0 0
        %589 = vmatpush1.bf16.msra.mxu0 %v496
        %590 = vmatprep.subr.bf16.mxu0 0
        %591 = vmatpush1.bf16.msra.mxu0 %v497
        %592 = vmatprep.subr.bf16.mxu0 0
        %593 = vmatpush1.bf16.msra.mxu0 %v498
        %594 = vmatprep.subr.bf16.mxu0 0
        %595 = vmatpush1.bf16.msra.mxu0 %v499
        %596 = vmatprep.subr.bf16.mxu0 0
        %597 = vmatpush1.bf16.msra.mxu0 %v500
        %598 = vmatprep.subr.bf16.mxu0 0
        %599 = vmatpush1.bf16.msra.mxu0 %v501
        %600 = vmatprep.subr.bf16.mxu0 0
        %601 = vmatpush1.bf16.msra.mxu0 %v502
        %602 = vmatprep.subr.bf16.mxu0 0
        %603 = vmatpush1.bf16.msra.mxu0 %v503
        %604 = vmatprep.subr.bf16.mxu0 0
        %605 = vmatpush1.bf16.msra.mxu0 %v504
        %606 = vmatprep.subr.bf16.mxu0 0
        %607 = vmatpush1.bf16.msra.mxu0 %v505
        %608 = vmatprep.subr.bf16.mxu0 0
        %609 = vmatpush1.bf16.msra.mxu0 %v506
        %610 = vmatprep.subr.bf16.mxu0 0
        %611 = vmatpush1.bf16.msra.mxu0 %v507
        %612 = vmatprep.mubr.bf16.mxu0 %v283
        %613 = vmatmul.mubr.bf16.gmra.mrb[0].mxu0 %v282
        %v614 = vpop.f32.mrb[0].mxu0
        %v615 = vadd.f32 %v575, %v614
        %v616 = vpop.f32.mrb[0].mxu0
        %v617 = vpop.f32.mrb[0].mxu0
        %v618 = vpop.f32.mrb[0].mxu0
        %619 = vdwg.mxu0
        %v620 = vadd.f32 %v275, %v615
        %621 = vst [vmem:[#allocation8] sm:$0xff] %v620
        %p622 = scmp.eq.s32.totalorder %s29, 1
        // Predicated region
        $region45: #{tpu_custom_call.1} parent=31 // pred_check
          %p623 = pneg %p622
        $region46: #{tpu_custom_call.1} parent=31 // pred_check_branch
          %625 = sbr.rel (%p623) target = $region48
        $region47: #{tpu_custom_call.1} parent=31 // pred_region
          %v626 = vld [vmem:[#allocation8] sm:$0xff]
          %v627 = vld [vmem:[%s2] sm:$0x1]
          %v629 = vlaneseq
          %v630 = vshrl.u32 %v629, 7
          %v631 = vsub.s32 0, %v630
          %v632 = vrot.slane %v627, %v631
          %v634 = vadd.f32 %v626, %v632
          %635 = vst [vmem:[#allocation8] sm:$0xff] %v634
          %v636 = vlaneseq
          %v637 = vshrl.u32 %v636, 7
          %s638 = smul.u32 %s28, 8
          %v639 = vstv %s638
          %v640 = vadd.s32 %v637, %v639
          %vm641 = vcmp.lt.s32.totalorder %v640, 4
          %v642 = vsel %vm641, 1, 0
          %v643 = vcvt.s32.f32 %v642
          %v644 = vmul.f32 %v634, %v634
          %645 = vadd.xlane.f32.xlu0 %v644
          %v646 = vpop.xlane.xlu0 %645
          %v647 = vrsqrt.pop %v646
          %v648 = vmul.f32 %v646, %v647
          %vm649 = vcmp.eq.f32.partialorder %v646, inf
          %v650 = vsel %vm649, %v646, %v648
          %vm651 = vcmp.eq.f32.partialorder %v646, 0.0
          %v652 = vand.u32 %v646, 2147483648
          %v653 = vsel %vm651, %v652, %v650
          %v654 = vmul.f32 %v653, %v643
          %vm655 = vcmask 7168
          %v656 = vsel %vm655, %v654, 0.0
          %657 = vadd.xlane.f32.xlu0 %v656
          %v658 = vpop.xlane.xlu0 %657
          %v659 = vrot.slane %v658, 4
          %v660 = vadd.f32 %v658, %v659
          %v661 = vrot.slane %v660, 2
          %v662 = vadd.f32 %v660, %v661
          %v663 = vrot.slane %v662, 1
          %v664 = vadd.f32 %v662, %v663
          %s665 = vtos %v664
          %s666 = scalar_lea.smem [#allocation9], 0
          %667 = sst [smem:[%s666]] %s665
        $region48: #{tpu_custom_call.1} parent=31 // pred_fallthru
          _
        // Predicated region
        $region49: #{tpu_custom_call.1} parent=31 // pred_check
          %p668 = pneg %p129
        $region50: #{tpu_custom_call.1} parent=31 // pred_check_branch
          %670 = sbr.rel (%p668) target = $region52
        $region51: #{tpu_custom_call.1} parent=31 // pred_region
          %s672 = ssub.s32 128, 128
          %673 = vsyncadd [#allocation4], %s672
          %s674 = smul.addr %s28, 128
          %s675 = scalar_lea.hbm %s3, %s674
          %s677 = sshll.u32 [#allocation8], 4
          %s678 = int_to_ptr.vmem [resolvable:$true] %s677
          %680 = dma.vmem_to_hbm [thread:$0]  %s678, 128, %s675, [#allocation4]
        $region52: #{tpu_custom_call.1} parent=31 // pred_fallthru
          _
        // Predicated region
        $region53: #{tpu_custom_call.1} parent=31 // pred_check
          %p681 = pneg %p155
        $region54: #{tpu_custom_call.1} parent=31 // pred_check_branch
          %683 = sbr.rel (%p681) target = $region56
        $region55: #{tpu_custom_call.1} parent=31 // pred_region
          %s685 = ssub.s32 16, 16
          %686 = vsyncadd [#allocation5], %s685
          %s687 = smul.addr %s28, 16
          %s688 = scalar_lea.hbm %s4, %s687
          %691 = dma.smem_to_hbm [#allocation9], 16, %s688, [#allocation5]
        $region56: #{tpu_custom_call.1} parent=31 // pred_fallthru
          _
        // Predicated region
        $region57: #{tpu_custom_call.1} parent=31 // pred_check
          %p692 = pneg %p129
        $region58: #{tpu_custom_call.1} parent=31 // pred_check_branch
          %694 = sbr.rel (%p692) target = $region60
        $region59: #{tpu_custom_call.1} parent=31 // pred_region
          %695 = dma.done [#allocation4], 128
        $region60: #{tpu_custom_call.1} parent=31 // pred_fallthru
          _
        // Predicated region
        $region61: #{tpu_custom_call.1} parent=31 // pred_check
          %p696 = pneg %p155
        $region62: #{tpu_custom_call.1} parent=31 // pred_check_branch
          %698 = sbr.rel (%p696) target = $region64
        $region63: #{tpu_custom_call.1} parent=31 // pred_region
          %699 = dma.done [#allocation5], 16
        $region64: #{tpu_custom_call.1} parent=31 // pred_fallthru
          _
        %700 = sfence
      $region32: #{tpu_custom_call.1} parent=5 // pred_fallthru
        _
      %p701 = scmp.le.s32.totalorder 2, %s19
      // Predicated region
      $region65: #{tpu_custom_call.1} parent=5 // pred_check
        %p702 = pneg %p701
      $region66: #{tpu_custom_call.1} parent=5 // pred_check_branch
        %704 = sbr.rel (%p702) target = $region68
      $region67: #{tpu_custom_call.1} parent=5 // pred_region
        %s705 = ssub.s32 %s19, 2
      $region68: #{tpu_custom_call.1} parent=5 // pred_fallthru
        _
    $region6: #{tpu_custom_call.1} parent=1 // loop_footer
      %s23 = sadd.s32 1, %s19
    $region7: #{tpu_custom_call.1} parent=1 // loop_footer_branch
      %18 = sbr.rel target = $region3
    $region8: #{tpu_custom_call.1} parent=1 // loop_exit
      _
    %706 = vsyncpa [#allocation3], 1
    %s707 = scalar_lea.sflag [#allocation3], 1
    %708 = vsyncpa %s707, 1
    %709 = vsyncpa [#allocation7], 1
    %s710 = scalar_lea.sflag [#allocation7], 1
    %711 = vsyncpa %s710, 1
    %712 = vsyncpa [#allocation4], 1
    %s713 = scalar_lea.sflag [#allocation4], 1
    %714 = vsyncpa %s713, 1
    %715 = vsyncpa [#allocation5], 1
    %s716 = scalar_lea.sflag [#allocation5], 1
    %717 = vsyncpa %s716, 1

</llo_original>
